<compile_context>
chip_gen: v6e
topology: v6e:2x2x1
jax: 0.10.0
libtpu: 0.0.40
codegen_flags: <defaults>
</compile_context>

<pallas_src>
import jax
import jax.numpy as jnp
from jax.experimental import pallas as pl
from jax.experimental.pallas import tpu as pltpu


def _make_kernel(n, cin, l0):
    l1, l2, l3 = l0 // 2, l0 // 4, l0 // 8   # stride-2 conv output lengths
    l4 = l3 - 1                              # k=4, s=1, p=1
    g1 = l1 // 4                             # rows per layer-1 phase group (= l2//2 = l3)
    g2 = l2 // 2
    neg = 0.2
    eps = 1e-5

    def kernel(p1_ref, w1_ref, b1_ref,
               w2_ref, b2_ref, g2_ref, be2_ref,
               w3_ref, b3_ref, g3_ref, be3_ref,
               w4_ref, b4_ref, o_ref):
        f32 = jnp.float32

        def leaky(v):
            return jnp.where(v > 0, v, neg * v)

        def batchnorm(y, gamma, beta):
            mean = jnp.mean(y, axis=0, keepdims=True)
            centered = y - mean                      # computed once, reused (review #8)
            var = jnp.mean(centered * centered, axis=0, keepdims=True)
            return gamma * (centered * jax.lax.rsqrt(var + eps)) + beta

        # +-1 row shifts with zero fill: XLU rotate + VPU select (no unaligned concats)
        def shift_down(a):   # [0, a[0], ..., a[-2]]
            r = pltpu.roll(a, 1, 0)
            idx = jax.lax.broadcasted_iota(jnp.int32, a.shape, 0)
            return jnp.where(idx == 0, 0.0, r)

        def shift_up(a):     # [a[1], ..., a[-1], 0]
            rows = a.shape[0]
            r = pltpu.roll(a, rows - 1, 0)
            idx = jax.lax.broadcasted_iota(jnp.int32, a.shape, 0)
            return jnp.where(idx == rows - 1, 0.0, r)

        # ---- layer 1: Conv1d(cin,32,k4,s2,p1) + LeakyReLU ------------------
        # One MXU matmul over the whole batch; rows are phase-ordered per sample:
        # within sample s, rows [m*g1:(m+1)*g1] hold y1[m::4].
        y1 = leaky(jnp.dot(p1_ref[...], w1_ref[...], preferred_element_type=f32)
                   + b1_ref[...])                                   # (n*l1, 32)

        # ---- layer 2: Conv1d(32,64,k4,s2,p1) + BN + LeakyReLU --------------
        # Taps folded into K=128 via lane concat of the 4 layer-1 phase groups.
        patches2 = []
        for s in range(n):
            blk = y1[s * l1:(s + 1) * l1]
            q0 = blk[0 * g1:1 * g1]   # y1[0::4]
            q1 = blk[1 * g1:2 * g1]   # y1[1::4]
            q2 = blk[2 * g1:3 * g1]   # y1[2::4]
            q3 = blk[3 * g1:4 * g1]   # y1[3::4]
            # even output rows y2[2i]:  taps = y1_pad[4i+0..3]
            patches2.append(jnp.concatenate([shift_down(q3), q0, q1, q2], axis=1))
            # odd  output rows y2[2i+1]: taps = y1_pad[4i+2..5]
            patches2.append(jnp.concatenate([q1, q2, q3, shift_up(q0)], axis=1))
        p2 = jnp.concatenate(patches2, axis=0)                       # (n*l2, 128)
        y2 = leaky(batchnorm(jnp.dot(p2, w2_ref[...], preferred_element_type=f32)
                             + b2_ref[...], g2_ref[...], be2_ref[...]))  # (n*l2, 64)
        # per sample: rows [0:g2] = y2[0::2], rows [g2:2*g2] = y2[1::2]

        # ---- layer 3: Conv1d(64,128,k4,s2,p1) + BN + LeakyReLU -------------
        # Taps folded into K=256; output rows come out in natural order.
        patches3 = []
        for s in range(n):
            blk = y2[s * l2:(s + 1) * l2]
            ev = blk[0:g2]            # y2[0::2]
            od = blk[g2:2 * g2]       # y2[1::2]
            # taps for output r: y2_pad[2r], y2_pad[2r+1], y2_pad[2r+2], y2_pad[2r+3]
            patches3.append(jnp.concatenate(
                [shift_down(od), ev, od, shift_up(ev)], axis=1))
        p3 = jnp.concatenate(patches3, axis=0)                       # (n*l3, 256)
        y3 = leaky(batchnorm(jnp.dot(p3, w3_ref[...], preferred_element_type=f32)
                             + b3_ref[...], g3_ref[...], be3_ref[...]))  # (n*l3, 128)

        # ---- layer 4: Conv1d(128,1,k4,s1,p1) + Sigmoid ----------------------
        # One (n*l3, 512) @ (512, 1) matmul + one store.  Row l3-1 of each sample
        # is out-of-range (zero-padded taps) and is dropped in the wrapper.
        patches4 = []
        for s in range(n):
            blk = y3[s * l3:(s + 1) * l3]                            # (l3, 128)
            su = shift_up(blk)
            patches4.append(jnp.concatenate(
                [shift_down(blk), blk, su, shift_up(su)], axis=1))   # (l3, 512)
        p4 = jnp.concatenate(patches4, axis=0)                       # (n*l3, 512)
        z = jnp.dot(p4, w4_ref[...], preferred_element_type=f32) + b4_ref[...]
        o_ref[...] = 1.0 / (1.0 + jnp.exp(-z))                       # single store

    return kernel, (l1, l2, l3, l4)


def init_params(key, input_channels=1):
    """Deterministic synthetic parameters matching the nn.Module shapes."""
    defs = [
        (input_channels, 32, 4),   # layer1 Conv1d
        (32, 64, 4),               # layer2 Conv1d
        (64, 128, 4),              # layer3 Conv1d
        (128, 1, 4),               # layer4 Conv1d
    ]
    params = {}
    keys = jax.random.split(key, 2 * len(defs))
    for i, (cin, cout, k) in enumerate(defs):
        w = 0.1 * jax.random.normal(keys[2 * i], (cout, cin, k), jnp.float32)
        b = 0.1 * jax.random.normal(keys[2 * i + 1], (cout,), jnp.float32)
        # PyTorch Conv1d weight (C_out, C_in, K) -> per-tap weight (K, C_in, C_out)
        params[f"w{i + 1}"] = jnp.transpose(w, (2, 1, 0))
        params[f"b{i + 1}"] = b.reshape(1, cout)
    # BatchNorm1d affine params (PyTorch defaults: gamma=1, beta=0)
    params["g2"] = jnp.ones((1, 64), jnp.float32)
    params["beta2"] = jnp.zeros((1, 64), jnp.float32)
    params["g3"] = jnp.ones((1, 128), jnp.float32)
    params["beta3"] = jnp.zeros((1, 128), jnp.float32)
    return params


@jax.jit
def discriminator_forward(x_ncl, params):
    n, cin, l0 = x_ncl.shape
    assert l0 % 8 == 0, "sequence length must be divisible by 8"

    kernel, (l1, l2, l3, l4) = _make_kernel(n, cin, l0)
    g1 = l1 // 4

    # ---- wrapper-side layout plumbing (tiny arrays, done once in XLA) -------
    x_nlc = jnp.transpose(x_ncl, (0, 2, 1)).astype(jnp.float32)      # (n, l0, cin)
    x_pad = jnp.pad(x_nlc, ((0, 0), (1, 1), (0, 0)))                 # (n, l0+2, cin)
    # layer-1 im2col: rows ordered by output phase (r mod 4) so the in-kernel
    # layer-2 patch slices are 8-row-aligned; lanes ordered (tap, channel).
    m = jnp.arange(4).reshape(4, 1, 1)
    j = jnp.arange(g1).reshape(1, g1, 1)
    t = jnp.arange(4).reshape(1, 1, 4)
    rows = 8 * j + 2 * m + t                                          # (4, g1, 4)
    p1 = x_pad[:, rows, :].reshape(n * l1, 4 * cin)

    def cat_k(w_kco):  # (K, C_in, C_out) -> (K*C_in, C_out), rows ordered (tap, channel)
        k, ci, co = w_kco.shape
        return w_kco.reshape(k * ci, co)

    out = pl.pallas_call(
        kernel,
        out_shape=jax.ShapeDtypeStruct((n * l3, 1), jnp.float32),
        in_specs=[pl.BlockSpec(memory_space=pltpu.MemorySpace.VMEM)] * 13,
        out_specs=pl.BlockSpec(memory_space=pltpu.MemorySpace.VMEM),
    )(p1,
      cat_k(params["w1"]), params["b1"],
      cat_k(params["w2"]), params["b2"], params["g2"], params["beta2"],
      cat_k(params["w3"]), params["b3"], params["g3"], params["beta3"],
      cat_k(params["w4"]), params["b4"])

    # drop the one out-of-range conv-4 row per sample, return NCL (n, 1, l4)
    out = out.reshape(n, l3)[:, :l4]
    return out[:, None, :]


def _ref_forward(x_ncl, params):
    """Pure-JAX (XLA) reference with identical semantics, for validation."""
    hp = jax.lax.Precision.HIGHEST

    def conv(x_nlc, w_kco, b_row, stride):
        nb, l, _ = x_nlc.shape
        k = w_kco.shape[0]
        xp = jnp.pad(x_nlc, ((0, 0), (1, 1), (0, 0)))
        l_out = (l + 2 - k) // stride + 1
        y = jnp.zeros((nb, l_out, w_kco.shape[-1]), jnp.float32)
        for t in range(k):
            tap = xp[:, t:t + stride * (l_out - 1) + 1:stride, :]
            y = y + jnp.einsum("nlc,co->nlo", tap, w_kco[t], precision=hp)
        return y + b_row

    def bn(y, g_row, be_row):
        mean = jnp.mean(y, axis=(0, 1), keepdims=True)
        var = jnp.mean(jnp.square(y - mean), axis=(0, 1), keepdims=True)
        return g_row * ((y - mean) * jax.lax.rsqrt(var + 1e-5)) + be_row

    def lrelu(v):
        return jnp.where(v > 0, v, 0.2 * v)

    x = jnp.transpose(x_ncl, (0, 2, 1)).astype(jnp.float32)
    x = lrelu(conv(x, params["w1"], params["b1"], 2))
    x = lrelu(bn(conv(x, params["w2"], params["b2"], 2), params["g2"], params["beta2"]))
    x = lrelu(bn(conv(x, params["w3"], params["b3"], 2), params["g3"], params["beta3"]))
    x = jax.nn.sigmoid(conv(x, params["w4"], params["b4"], 1))
    return jnp.transpose(x, (0, 2, 1))


if __name__ == "__main__":
    key = jax.random.PRNGKey(0)
    k_x, k_p = jax.random.split(key)
    # PyTorch-style input: (N=2, C_in=1, L=64)
    x = jax.random.normal(k_x, (2, 1, 64), jnp.float32)
    params = init_params(k_p, input_channels=1)

    out = jax.block_until_ready(discriminator_forward(x, params))
    # L: 64 -> 32 -> 16 -> 8 -> 7 ; C: 1 -> 32 -> 64 -> 128 -> 1
    assert out.shape == (2, 1, 7), out.shape
    assert bool(jnp.all((out >= 0.0) & (out <= 1.0)))

    ref = _ref_forward(x, params)
    max_err = float(jnp.max(jnp.abs(out - ref)))
    assert max_err < 5e-3, max_err

    print("KERNEL_OK")
</pallas_src>

<mosaic_0001>
module attributes {stable_mosaic.version = 11 : i64} {
  func.func @kernel(%arg0: memref<64x4xf32, #tpu.memory_space<vmem>>, %arg1: memref<4x32xf32, #tpu.memory_space<vmem>>, %arg2: memref<1x32xf32, #tpu.memory_space<vmem>>, %arg3: memref<128x64xf32, #tpu.memory_space<vmem>>, %arg4: memref<1x64xf32, #tpu.memory_space<vmem>>, %arg5: memref<1x64xf32, #tpu.memory_space<vmem>>, %arg6: memref<1x64xf32, #tpu.memory_space<vmem>>, %arg7: memref<256x128xf32, #tpu.memory_space<vmem>>, %arg8: memref<1x128xf32, #tpu.memory_space<vmem>>, %arg9: memref<1x128xf32, #tpu.memory_space<vmem>>, %arg10: memref<1x128xf32, #tpu.memory_space<vmem>>, %arg11: memref<512x1xf32, #tpu.memory_space<vmem>>, %arg12: memref<1x1xf32, #tpu.memory_space<vmem>>, %arg13: memref<16x1xf32, #tpu.memory_space<vmem>>) attributes {dimension_semantics = [], scalar_prefetch = 0 : i64, scratch_operands = 0 : i64, tpu.core_type = #tpu.core_type<tc>} {
    %c0 = arith.constant 0 : index
    %c0_0 = arith.constant 0 : index
    %0 = vector.load %arg0[%c0, %c0_0] : memref<64x4xf32, #tpu.memory_space<vmem>>, vector<64x4xf32>
    %c0_1 = arith.constant 0 : index
    %c0_2 = arith.constant 0 : index
    %1 = vector.load %arg1[%c0_1, %c0_2] : memref<4x32xf32, #tpu.memory_space<vmem>>, vector<4x32xf32>
    %cst = arith.constant dense<0.000000e+00> : vector<64x32xf32>
    %2 = tpu.matmul %0, %1, %cst {dimension_numbers = #tpu.dot_dimension_numbers<[1], [0], [0], [1], [0, 0, 1, 1], [], []>} : vector<64x4xf32>, vector<4x32xf32>, vector<64x32xf32> -> vector<64x32xf32>
    %c0_3 = arith.constant 0 : index
    %c0_4 = arith.constant 0 : index
    %3 = vector.load %arg2[%c0_3, %c0_4] : memref<1x32xf32, #tpu.memory_space<vmem>>, vector<1x32xf32>
    %4 = vector.broadcast %3 : vector<1x32xf32> to vector<64x32xf32>
    %5 = arith.addf %2, %4 : vector<64x32xf32>
    %cst_5 = arith.constant 0.000000e+00 : f32
    %6 = vector.broadcast %cst_5 : f32 to vector<64x32xf32>
    %7 = arith.cmpf ogt, %5, %6 : vector<64x32xf32>
    %cst_6 = arith.constant 2.000000e-01 : f32
    %8 = vector.broadcast %cst_6 : f32 to vector<64x32xf32>
    %9 = arith.mulf %8, %5 : vector<64x32xf32>
    %10 = arith.select %7, %5, %9 : vector<64x32xi1>, vector<64x32xf32>
    %11 = vector.extract_strided_slice %10 {offsets = [0, 0], sizes = [32, 32], strides = [1, 1]} : vector<64x32xf32> to vector<32x32xf32>
    %12 = vector.extract_strided_slice %11 {offsets = [0, 0], sizes = [8, 32], strides = [1, 1]} : vector<32x32xf32> to vector<8x32xf32>
    %13 = vector.extract_strided_slice %11 {offsets = [8, 0], sizes = [8, 32], strides = [1, 1]} : vector<32x32xf32> to vector<8x32xf32>
    %14 = vector.extract_strided_slice %11 {offsets = [16, 0], sizes = [8, 32], strides = [1, 1]} : vector<32x32xf32> to vector<8x32xf32>
    %15 = vector.extract_strided_slice %11 {offsets = [24, 0], sizes = [8, 32], strides = [1, 1]} : vector<32x32xf32> to vector<8x32xf32>
    %c1_i32 = arith.constant 1 : i32
    %16 = tpu.dynamic_rotate %15 by %c1_i32 dim 0 : vector<8x32xf32>, i32 -> vector<8x32xf32>
    %17 = tpu.iota {dimensions = array<i32: 0>} : vector<8x32xi32>
    %c0_i32 = arith.constant 0 : i32
    %18 = vector.broadcast %c0_i32 : i32 to vector<8x32xi32>
    %19 = arith.cmpi eq, %17, %18 : vector<8x32xi32>
    %cst_7 = arith.constant 0.000000e+00 : f32
    %20 = vector.broadcast %cst_7 : f32 to vector<8x32xf32>
    %21 = arith.select %19, %20, %16 : vector<8x32xi1>, vector<8x32xf32>
    %22 = tpu.concatenate %21, %12, %13, %14 in 1 : vector<8x32xf32>, vector<8x32xf32>, vector<8x32xf32>, vector<8x32xf32> -> vector<8x128xf32>
    %c7_i32 = arith.constant 7 : i32
    %23 = tpu.dynamic_rotate %12 by %c7_i32 dim 0 : vector<8x32xf32>, i32 -> vector<8x32xf32>
    %24 = tpu.iota {dimensions = array<i32: 0>} : vector<8x32xi32>
    %c7_i32_8 = arith.constant 7 : i32
    %25 = vector.broadcast %c7_i32_8 : i32 to vector<8x32xi32>
    %26 = arith.cmpi eq, %24, %25 : vector<8x32xi32>
    %cst_9 = arith.constant 0.000000e+00 : f32
    %27 = vector.broadcast %cst_9 : f32 to vector<8x32xf32>
    %28 = arith.select %26, %27, %23 : vector<8x32xi1>, vector<8x32xf32>
    %29 = tpu.concatenate %13, %14, %15, %28 in 1 : vector<8x32xf32>, vector<8x32xf32>, vector<8x32xf32>, vector<8x32xf32> -> vector<8x128xf32>
    %30 = vector.extract_strided_slice %10 {offsets = [32, 0], sizes = [32, 32], strides = [1, 1]} : vector<64x32xf32> to vector<32x32xf32>
    %31 = vector.extract_strided_slice %30 {offsets = [0, 0], sizes = [8, 32], strides = [1, 1]} : vector<32x32xf32> to vector<8x32xf32>
    %32 = vector.extract_strided_slice %30 {offsets = [8, 0], sizes = [8, 32], strides = [1, 1]} : vector<32x32xf32> to vector<8x32xf32>
    %33 = vector.extract_strided_slice %30 {offsets = [16, 0], sizes = [8, 32], strides = [1, 1]} : vector<32x32xf32> to vector<8x32xf32>
    %34 = vector.extract_strided_slice %30 {offsets = [24, 0], sizes = [8, 32], strides = [1, 1]} : vector<32x32xf32> to vector<8x32xf32>
    %c1_i32_10 = arith.constant 1 : i32
    %35 = tpu.dynamic_rotate %34 by %c1_i32_10 dim 0 : vector<8x32xf32>, i32 -> vector<8x32xf32>
    %36 = tpu.iota {dimensions = array<i32: 0>} : vector<8x32xi32>
    %c0_i32_11 = arith.constant 0 : i32
    %37 = vector.broadcast %c0_i32_11 : i32 to vector<8x32xi32>
    %38 = arith.cmpi eq, %36, %37 : vector<8x32xi32>
    %cst_12 = arith.constant 0.000000e+00 : f32
    %39 = vector.broadcast %cst_12 : f32 to vector<8x32xf32>
    %40 = arith.select %38, %39, %35 : vector<8x32xi1>, vector<8x32xf32>
    %41 = tpu.concatenate %40, %31, %32, %33 in 1 : vector<8x32xf32>, vector<8x32xf32>, vector<8x32xf32>, vector<8x32xf32> -> vector<8x128xf32>
    %c7_i32_13 = arith.constant 7 : i32
    %42 = tpu.dynamic_rotate %31 by %c7_i32_13 dim 0 : vector<8x32xf32>, i32 -> vector<8x32xf32>
    %43 = tpu.iota {dimensions = array<i32: 0>} : vector<8x32xi32>
    %c7_i32_14 = arith.constant 7 : i32
    %44 = vector.broadcast %c7_i32_14 : i32 to vector<8x32xi32>
    %45 = arith.cmpi eq, %43, %44 : vector<8x32xi32>
    %cst_15 = arith.constant 0.000000e+00 : f32
    %46 = vector.broadcast %cst_15 : f32 to vector<8x32xf32>
    %47 = arith.select %45, %46, %42 : vector<8x32xi1>, vector<8x32xf32>
    %48 = tpu.concatenate %32, %33, %34, %47 in 1 : vector<8x32xf32>, vector<8x32xf32>, vector<8x32xf32>, vector<8x32xf32> -> vector<8x128xf32>
    %49 = tpu.concatenate %22, %29, %41, %48 in 0 : vector<8x128xf32>, vector<8x128xf32>, vector<8x128xf32>, vector<8x128xf32> -> vector<32x128xf32>
    %c0_16 = arith.constant 0 : index
    %c0_17 = arith.constant 0 : index
    %50 = vector.load %arg3[%c0_16, %c0_17] : memref<128x64xf32, #tpu.memory_space<vmem>>, vector<128x64xf32>
    %cst_18 = arith.constant dense<0.000000e+00> : vector<32x64xf32>
    %51 = tpu.matmul %49, %50, %cst_18 {dimension_numbers = #tpu.dot_dimension_numbers<[1], [0], [0], [1], [0, 0, 1, 1], [], []>} : vector<32x128xf32>, vector<128x64xf32>, vector<32x64xf32> -> vector<32x64xf32>
    %c0_19 = arith.constant 0 : index
    %c0_20 = arith.constant 0 : index
    %52 = vector.load %arg4[%c0_19, %c0_20] : memref<1x64xf32, #tpu.memory_space<vmem>>, vector<1x64xf32>
    %53 = vector.broadcast %52 : vector<1x64xf32> to vector<32x64xf32>
    %54 = arith.addf %51, %53 : vector<32x64xf32>
    %c0_21 = arith.constant 0 : index
    %c0_22 = arith.constant 0 : index
    %55 = vector.load %arg5[%c0_21, %c0_22] : memref<1x64xf32, #tpu.memory_space<vmem>>, vector<1x64xf32>
    %c0_23 = arith.constant 0 : index
    %c0_24 = arith.constant 0 : index
    %56 = vector.load %arg6[%c0_23, %c0_24] : memref<1x64xf32, #tpu.memory_space<vmem>>, vector<1x64xf32>
    %cst_25 = arith.constant dense<0.000000e+00> : vector<64xf32>
    %57 = vector.multi_reduction <add>, %54, %cst_25 [0] : vector<32x64xf32> to vector<64xf32>
    %58 = vector.shape_cast %57 : vector<64xf32> to vector<1x64xf32>
    %cst_26 = arith.constant 3.200000e+01 : f32
    %59 = vector.broadcast %cst_26 : f32 to vector<1x64xf32>
    %60 = arith.divf %58, %59 : vector<1x64xf32>
    %61 = vector.broadcast %60 : vector<1x64xf32> to vector<32x64xf32>
    %62 = arith.subf %54, %61 : vector<32x64xf32>
    %63 = arith.mulf %62, %62 : vector<32x64xf32>
    %cst_27 = arith.constant dense<0.000000e+00> : vector<64xf32>
    %64 = vector.multi_reduction <add>, %63, %cst_27 [0] : vector<32x64xf32> to vector<64xf32>
    %65 = vector.shape_cast %64 : vector<64xf32> to vector<1x64xf32>
    %cst_28 = arith.constant 3.200000e+01 : f32
    %66 = vector.broadcast %cst_28 : f32 to vector<1x64xf32>
    %67 = arith.divf %65, %66 : vector<1x64xf32>
    %cst_29 = arith.constant 9.99999974E-6 : f32
    %68 = vector.broadcast %cst_29 : f32 to vector<1x64xf32>
    %69 = arith.addf %67, %68 : vector<1x64xf32>
    %70 = math.rsqrt %69 : vector<1x64xf32>
    %71 = vector.broadcast %70 : vector<1x64xf32> to vector<32x64xf32>
    %72 = arith.mulf %62, %71 : vector<32x64xf32>
    %73 = vector.broadcast %55 : vector<1x64xf32> to vector<32x64xf32>
    %74 = arith.mulf %73, %72 : vector<32x64xf32>
    %75 = vector.broadcast %56 : vector<1x64xf32> to vector<32x64xf32>
    %76 = arith.addf %74, %75 : vector<32x64xf32>
    %cst_30 = arith.constant 0.000000e+00 : f32
    %77 = vector.broadcast %cst_30 : f32 to vector<32x64xf32>
    %78 = arith.cmpf ogt, %76, %77 : vector<32x64xf32>
    %cst_31 = arith.constant 2.000000e-01 : f32
    %79 = vector.broadcast %cst_31 : f32 to vector<32x64xf32>
    %80 = arith.mulf %79, %76 : vector<32x64xf32>
    %81 = arith.select %78, %76, %80 : vector<32x64xi1>, vector<32x64xf32>
    %82 = vector.extract_strided_slice %81 {offsets = [0, 0], sizes = [16, 64], strides = [1, 1]} : vector<32x64xf32> to vector<16x64xf32>
    %83 = vector.extract_strided_slice %82 {offsets = [0, 0], sizes = [8, 64], strides = [1, 1]} : vector<16x64xf32> to vector<8x64xf32>
    %84 = vector.extract_strided_slice %82 {offsets = [8, 0], sizes = [8, 64], strides = [1, 1]} : vector<16x64xf32> to vector<8x64xf32>
    %c1_i32_32 = arith.constant 1 : i32
    %85 = tpu.dynamic_rotate %84 by %c1_i32_32 dim 0 : vector<8x64xf32>, i32 -> vector<8x64xf32>
    %86 = tpu.iota {dimensions = array<i32: 0>} : vector<8x64xi32>
    %c0_i32_33 = arith.constant 0 : i32
    %87 = vector.broadcast %c0_i32_33 : i32 to vector<8x64xi32>
    %88 = arith.cmpi eq, %86, %87 : vector<8x64xi32>
    %cst_34 = arith.constant 0.000000e+00 : f32
    %89 = vector.broadcast %cst_34 : f32 to vector<8x64xf32>
    %90 = arith.select %88, %89, %85 : vector<8x64xi1>, vector<8x64xf32>
    %c7_i32_35 = arith.constant 7 : i32
    %91 = tpu.dynamic_rotate %83 by %c7_i32_35 dim 0 : vector<8x64xf32>, i32 -> vector<8x64xf32>
    %92 = tpu.iota {dimensions = array<i32: 0>} : vector<8x64xi32>
    %c7_i32_36 = arith.constant 7 : i32
    %93 = vector.broadcast %c7_i32_36 : i32 to vector<8x64xi32>
    %94 = arith.cmpi eq, %92, %93 : vector<8x64xi32>
    %cst_37 = arith.constant 0.000000e+00 : f32
    %95 = vector.broadcast %cst_37 : f32 to vector<8x64xf32>
    %96 = arith.select %94, %95, %91 : vector<8x64xi1>, vector<8x64xf32>
    %97 = tpu.concatenate %90, %83, %84, %96 in 1 : vector<8x64xf32>, vector<8x64xf32>, vector<8x64xf32>, vector<8x64xf32> -> vector<8x256xf32>
    %98 = vector.extract_strided_slice %81 {offsets = [16, 0], sizes = [16, 64], strides = [1, 1]} : vector<32x64xf32> to vector<16x64xf32>
    %99 = vector.extract_strided_slice %98 {offsets = [0, 0], sizes = [8, 64], strides = [1, 1]} : vector<16x64xf32> to vector<8x64xf32>
    %100 = vector.extract_strided_slice %98 {offsets = [8, 0], sizes = [8, 64], strides = [1, 1]} : vector<16x64xf32> to vector<8x64xf32>
    %c1_i32_38 = arith.constant 1 : i32
    %101 = tpu.dynamic_rotate %100 by %c1_i32_38 dim 0 : vector<8x64xf32>, i32 -> vector<8x64xf32>
    %102 = tpu.iota {dimensions = array<i32: 0>} : vector<8x64xi32>
    %c0_i32_39 = arith.constant 0 : i32
    %103 = vector.broadcast %c0_i32_39 : i32 to vector<8x64xi32>
    %104 = arith.cmpi eq, %102, %103 : vector<8x64xi32>
    %cst_40 = arith.constant 0.000000e+00 : f32
    %105 = vector.broadcast %cst_40 : f32 to vector<8x64xf32>
    %106 = arith.select %104, %105, %101 : vector<8x64xi1>, vector<8x64xf32>
    %c7_i32_41 = arith.constant 7 : i32
    %107 = tpu.dynamic_rotate %99 by %c7_i32_41 dim 0 : vector<8x64xf32>, i32 -> vector<8x64xf32>
    %108 = tpu.iota {dimensions = array<i32: 0>} : vector<8x64xi32>
    %c7_i32_42 = arith.constant 7 : i32
    %109 = vector.broadcast %c7_i32_42 : i32 to vector<8x64xi32>
    %110 = arith.cmpi eq, %108, %109 : vector<8x64xi32>
    %cst_43 = arith.constant 0.000000e+00 : f32
    %111 = vector.broadcast %cst_43 : f32 to vector<8x64xf32>
    %112 = arith.select %110, %111, %107 : vector<8x64xi1>, vector<8x64xf32>
    %113 = tpu.concatenate %106, %99, %100, %112 in 1 : vector<8x64xf32>, vector<8x64xf32>, vector<8x64xf32>, vector<8x64xf32> -> vector<8x256xf32>
    %114 = tpu.concatenate %97, %113 in 0 : vector<8x256xf32>, vector<8x256xf32> -> vector<16x256xf32>
    %c0_44 = arith.constant 0 : index
    %c0_45 = arith.constant 0 : index
    %115 = vector.load %arg7[%c0_44, %c0_45] : memref<256x128xf32, #tpu.memory_space<vmem>>, vector<256x128xf32>
    %cst_46 = arith.constant dense<0.000000e+00> : vector<16x128xf32>
    %116 = tpu.matmul %114, %115, %cst_46 {dimension_numbers = #tpu.dot_dimension_numbers<[1], [0], [0], [1], [0, 0, 1, 1], [], []>} : vector<16x256xf32>, vector<256x128xf32>, vector<16x128xf32> -> vector<16x128xf32>
    %c0_47 = arith.constant 0 : index
    %c0_48 = arith.constant 0 : index
    %117 = vector.load %arg8[%c0_47, %c0_48] : memref<1x128xf32, #tpu.memory_space<vmem>>, vector<1x128xf32>
    %118 = vector.broadcast %117 : vector<1x128xf32> to vector<16x128xf32>
    %119 = arith.addf %116, %118 : vector<16x128xf32>
    %c0_49 = arith.constant 0 : index
    %c0_50 = arith.constant 0 : index
    %120 = vector.load %arg9[%c0_49, %c0_50] : memref<1x128xf32, #tpu.memory_space<vmem>>, vector<1x128xf32>
    %c0_51 = arith.constant 0 : index
    %c0_52 = arith.constant 0 : index
    %121 = vector.load %arg10[%c0_51, %c0_52] : memref<1x128xf32, #tpu.memory_space<vmem>>, vector<1x128xf32>
    %cst_53 = arith.constant dense<0.000000e+00> : vector<128xf32>
    %122 = vector.multi_reduction <add>, %119, %cst_53 [0] : vector<16x128xf32> to vector<128xf32>
    %123 = vector.shape_cast %122 : vector<128xf32> to vector<1x128xf32>
    %cst_54 = arith.constant 1.600000e+01 : f32
    %124 = vector.broadcast %cst_54 : f32 to vector<1x128xf32>
    %125 = arith.divf %123, %124 : vector<1x128xf32>
    %126 = vector.broadcast %125 : vector<1x128xf32> to vector<16x128xf32>
    %127 = arith.subf %119, %126 : vector<16x128xf32>
    %128 = arith.mulf %127, %127 : vector<16x128xf32>
    %cst_55 = arith.constant dense<0.000000e+00> : vector<128xf32>
    %129 = vector.multi_reduction <add>, %128, %cst_55 [0] : vector<16x128xf32> to vector<128xf32>
    %130 = vector.shape_cast %129 : vector<128xf32> to vector<1x128xf32>
    %cst_56 = arith.constant 1.600000e+01 : f32
    %131 = vector.broadcast %cst_56 : f32 to vector<1x128xf32>
    %132 = arith.divf %130, %131 : vector<1x128xf32>
    %cst_57 = arith.constant 9.99999974E-6 : f32
    %133 = vector.broadcast %cst_57 : f32 to vector<1x128xf32>
    %134 = arith.addf %132, %133 : vector<1x128xf32>
    %135 = math.rsqrt %134 : vector<1x128xf32>
    %136 = vector.broadcast %135 : vector<1x128xf32> to vector<16x128xf32>
    %137 = arith.mulf %127, %136 : vector<16x128xf32>
    %138 = vector.broadcast %120 : vector<1x128xf32> to vector<16x128xf32>
    %139 = arith.mulf %138, %137 : vector<16x128xf32>
    %140 = vector.broadcast %121 : vector<1x128xf32> to vector<16x128xf32>
    %141 = arith.addf %139, %140 : vector<16x128xf32>
    %cst_58 = arith.constant 0.000000e+00 : f32
    %142 = vector.broadcast %cst_58 : f32 to vector<16x128xf32>
    %143 = arith.cmpf ogt, %141, %142 : vector<16x128xf32>
    %cst_59 = arith.constant 2.000000e-01 : f32
    %144 = vector.broadcast %cst_59 : f32 to vector<16x128xf32>
    %145 = arith.mulf %144, %141 : vector<16x128xf32>
    %146 = arith.select %143, %141, %145 : vector<16x128xi1>, vector<16x128xf32>
    %147 = vector.extract_strided_slice %146 {offsets = [0, 0], sizes = [8, 128], strides = [1, 1]} : vector<16x128xf32> to vector<8x128xf32>
    %c7_i32_60 = arith.constant 7 : i32
    %148 = tpu.dynamic_rotate %147 by %c7_i32_60 dim 0 : vector<8x128xf32>, i32 -> vector<8x128xf32>
    %149 = tpu.iota {dimensions = array<i32: 0>} : vector<8x128xi32>
    %c7_i32_61 = arith.constant 7 : i32
    %150 = vector.broadcast %c7_i32_61 : i32 to vector<8x128xi32>
    %151 = arith.cmpi eq, %149, %150 : vector<8x128xi32>
    %cst_62 = arith.constant 0.000000e+00 : f32
    %152 = vector.broadcast %cst_62 : f32 to vector<8x128xf32>
    %153 = arith.select %151, %152, %148 : vector<8x128xi1>, vector<8x128xf32>
    %c1_i32_63 = arith.constant 1 : i32
    %154 = tpu.dynamic_rotate %147 by %c1_i32_63 dim 0 : vector<8x128xf32>, i32 -> vector<8x128xf32>
    %155 = tpu.iota {dimensions = array<i32: 0>} : vector<8x128xi32>
    %c0_i32_64 = arith.constant 0 : i32
    %156 = vector.broadcast %c0_i32_64 : i32 to vector<8x128xi32>
    %157 = arith.cmpi eq, %155, %156 : vector<8x128xi32>
    %cst_65 = arith.constant 0.000000e+00 : f32
    %158 = vector.broadcast %cst_65 : f32 to vector<8x128xf32>
    %159 = arith.select %157, %158, %154 : vector<8x128xi1>, vector<8x128xf32>
    %c7_i32_66 = arith.constant 7 : i32
    %160 = tpu.dynamic_rotate %153 by %c7_i32_66 dim 0 : vector<8x128xf32>, i32 -> vector<8x128xf32>
    %161 = tpu.iota {dimensions = array<i32: 0>} : vector<8x128xi32>
    %c7_i32_67 = arith.constant 7 : i32
    %162 = vector.broadcast %c7_i32_67 : i32 to vector<8x128xi32>
    %163 = arith.cmpi eq, %161, %162 : vector<8x128xi32>
    %cst_68 = arith.constant 0.000000e+00 : f32
    %164 = vector.broadcast %cst_68 : f32 to vector<8x128xf32>
    %165 = arith.select %163, %164, %160 : vector<8x128xi1>, vector<8x128xf32>
    %166 = tpu.concatenate %159, %147, %153, %165 in 1 : vector<8x128xf32>, vector<8x128xf32>, vector<8x128xf32>, vector<8x128xf32> -> vector<8x512xf32>
    %167 = vector.extract_strided_slice %146 {offsets = [8, 0], sizes = [8, 128], strides = [1, 1]} : vector<16x128xf32> to vector<8x128xf32>
    %c7_i32_69 = arith.constant 7 : i32
    %168 = tpu.dynamic_rotate %167 by %c7_i32_69 dim 0 : vector<8x128xf32>, i32 -> vector<8x128xf32>
    %169 = tpu.iota {dimensions = array<i32: 0>} : vector<8x128xi32>
    %c7_i32_70 = arith.constant 7 : i32
    %170 = vector.broadcast %c7_i32_70 : i32 to vector<8x128xi32>
    %171 = arith.cmpi eq, %169, %170 : vector<8x128xi32>
    %cst_71 = arith.constant 0.000000e+00 : f32
    %172 = vector.broadcast %cst_71 : f32 to vector<8x128xf32>
    %173 = arith.select %171, %172, %168 : vector<8x128xi1>, vector<8x128xf32>
    %c1_i32_72 = arith.constant 1 : i32
    %174 = tpu.dynamic_rotate %167 by %c1_i32_72 dim 0 : vector<8x128xf32>, i32 -> vector<8x128xf32>
    %175 = tpu.iota {dimensions = array<i32: 0>} : vector<8x128xi32>
    %c0_i32_73 = arith.constant 0 : i32
    %176 = vector.broadcast %c0_i32_73 : i32 to vector<8x128xi32>
    %177 = arith.cmpi eq, %175, %176 : vector<8x128xi32>
    %cst_74 = arith.constant 0.000000e+00 : f32
    %178 = vector.broadcast %cst_74 : f32 to vector<8x128xf32>
    %179 = arith.select %177, %178, %174 : vector<8x128xi1>, vector<8x128xf32>
    %c7_i32_75 = arith.constant 7 : i32
    %180 = tpu.dynamic_rotate %173 by %c7_i32_75 dim 0 : vector<8x128xf32>, i32 -> vector<8x128xf32>
    %181 = tpu.iota {dimensions = array<i32: 0>} : vector<8x128xi32>
    %c7_i32_76 = arith.constant 7 : i32
    %182 = vector.broadcast %c7_i32_76 : i32 to vector<8x128xi32>
    %183 = arith.cmpi eq, %181, %182 : vector<8x128xi32>
    %cst_77 = arith.constant 0.000000e+00 : f32
    %184 = vector.broadcast %cst_77 : f32 to vector<8x128xf32>
    %185 = arith.select %183, %184, %180 : vector<8x128xi1>, vector<8x128xf32>
    %186 = tpu.concatenate %179, %167, %173, %185 in 1 : vector<8x128xf32>, vector<8x128xf32>, vector<8x128xf32>, vector<8x128xf32> -> vector<8x512xf32>
    %187 = tpu.concatenate %166, %186 in 0 : vector<8x512xf32>, vector<8x512xf32> -> vector<16x512xf32>
    %c0_78 = arith.constant 0 : index
    %c0_79 = arith.constant 0 : index
    %188 = vector.load %arg11[%c0_78, %c0_79] : memref<512x1xf32, #tpu.memory_space<vmem>>, vector<512x1xf32>
    %cst_80 = arith.constant dense<0.000000e+00> : vector<16x1xf32>
    %189 = tpu.matmul %187, %188, %cst_80 {dimension_numbers = #tpu.dot_dimension_numbers<[1], [0], [0], [1], [0, 0, 1, 1], [], []>} : vector<16x512xf32>, vector<512x1xf32>, vector<16x1xf32> -> vector<16x1xf32>
    %c0_81 = arith.constant 0 : index
    %c0_82 = arith.constant 0 : index
    %190 = vector.load %arg12[%c0_81, %c0_82] : memref<1x1xf32, #tpu.memory_space<vmem>>, vector<1x1xf32>
    %191 = vector.broadcast %190 : vector<1x1xf32> to vector<16x1xf32>
    %192 = arith.addf %189, %191 : vector<16x1xf32>
    %cst_83 = arith.constant 0.000000e+00 : f32
    %193 = vector.broadcast %cst_83 : f32 to vector<16x1xf32>
    %194 = arith.subf %193, %192 : vector<16x1xf32>
    %195 = math.exp %194 : vector<16x1xf32>
    %cst_84 = arith.constant 1.000000e+00 : f32
    %196 = vector.broadcast %cst_84 : f32 to vector<16x1xf32>
    %197 = arith.addf %196, %195 : vector<16x1xf32>
    %cst_85 = arith.constant 1.000000e+00 : f32
    %198 = vector.broadcast %cst_85 : f32 to vector<16x1xf32>
    %199 = arith.divf %198, %197 : vector<16x1xf32>
    %c0_86 = arith.constant 0 : index
    %c0_87 = arith.constant 0 : index
    %200 = vector.load %arg13[%c0_86, %c0_87] : memref<16x1xf32, #tpu.memory_space<vmem>>, vector<16x1xf32>
    tpu.vector_store %arg13[%c0_86, %c0_87], %199 {strides = array<i32>} : memref<16x1xf32, #tpu.memory_space<vmem>>, vector<16x1xf32>,
    return
  }
}

</mosaic_0001>

<llo_original>
// kernel: discriminator_forward.1
$region0: #{discriminator_forward.1}
  #allocation0 [shape = 'u32[]', space=smem, size = 0x4, offset = 0x4, fixed_abs, tag = 'smem constant byte address 0x4 - core index']
  #allocation1 [shape = 'u32[144,128]{1,0:T(1,128)}', space=vmem, size = 0x12000, scoped, tag = 'internal scratch']
  #allocation2 [shape = 'f32[1,1]{1,0:T(1,128)S(1)}', space=vmem, size = 0x200, scoped, tag = 'scoped memory for discriminator_forward.1']
  %s0 = inlined_call_operand.vmem [shape: f32[64,4], index: 0, kind: input, shape index: {}]
  %s1 = inlined_call_operand.vmem [shape: f32[4,32], index: 1, kind: input, shape index: {}]
  %s2 = inlined_call_operand.vmem [shape: f32[1,32], index: 2, kind: input, shape index: {}]
  %s3 = inlined_call_operand.vmem [shape: f32[128,64], index: 3, kind: input, shape index: {}]
  %s4 = inlined_call_operand.vmem [shape: f32[1,64], index: 4, kind: input, shape index: {}]
  %s5 = inlined_call_operand.vmem [shape: f32[1,64], index: 5, kind: input, shape index: {}]
  %s6 = inlined_call_operand.vmem [shape: f32[1,64], index: 6, kind: input, shape index: {}]
  %s7 = inlined_call_operand.vmem [shape: f32[256,128], index: 7, kind: input, shape index: {}]
  %s8 = inlined_call_operand.vmem [shape: f32[1,128], index: 8, kind: input, shape index: {}]
  %s9 = inlined_call_operand.vmem [shape: f32[1,128], index: 9, kind: input, shape index: {}]
  %s10 = inlined_call_operand.vmem [shape: f32[1,128], index: 10, kind: input, shape index: {}]
  %s11 = inlined_call_operand.vmem [shape: f32[512,1], index: 11, kind: input, shape index: {}]
  %s12 = inlined_call_operand.<no memory space> [shape: f32[1,1], index: 12, kind: input, shape index: {}]
  %s13 = inlined_call_operand.vmem [shape: f32[16,1], index: 13, kind: output, shape index: {}]
  %s14 = sld [smem:[#allocation0]]
  $region62: #{discriminator_forward.1} parent=0
    _
  %s16 = ssub.s32 1, %s14
  %s17 = scalar_select 0, %s16, %s14
  %v18 = vstv %s12
  %19 = vst [vmem:[#allocation2] sm:$0x1] %v18
  // Predicated region
  $region2: #{discriminator_forward.1} parent=0 // pred_check
    _
  $region3: #{discriminator_forward.1} parent=0 // pred_check_branch
    %21 = sbr.rel (0) target = $region5
  $region4: #{discriminator_forward.1} parent=0 // pred_region
    _
  $region5: #{discriminator_forward.1} parent=0 // pred_fallthru
    _
  // Predicated region
  $region6: #{discriminator_forward.1} parent=0 // pred_check
    _
  $region7: #{discriminator_forward.1} parent=0 // pred_check_branch
    %23 = sbr.rel (0) target = $region9
  $region8: #{discriminator_forward.1} parent=0 // pred_region
    _
  $region9: #{discriminator_forward.1} parent=0 // pred_fallthru
    _
  // Predicated region
  $region10: #{discriminator_forward.1} parent=0 // pred_check
    _
  $region11: #{discriminator_forward.1} parent=0 // pred_check_branch
    %25 = sbr.rel (0) target = $region13
  $region12: #{discriminator_forward.1} parent=0 // pred_region
    _
  $region13: #{discriminator_forward.1} parent=0 // pred_fallthru
    _
  // Predicated region
  $region14: #{discriminator_forward.1} parent=0 // pred_check
    _
  $region15: #{discriminator_forward.1} parent=0 // pred_check_branch
    %27 = sbr.rel (0) target = $region17
  $region16: #{discriminator_forward.1} parent=0 // pred_region
    _
  $region17: #{discriminator_forward.1} parent=0 // pred_fallthru
    _
  // Predicated region
  $region18: #{discriminator_forward.1} parent=0 // pred_check
    _
  $region19: #{discriminator_forward.1} parent=0 // pred_check_branch
    %29 = sbr.rel (0) target = $region21
  $region20: #{discriminator_forward.1} parent=0 // pred_region
    _
  $region21: #{discriminator_forward.1} parent=0 // pred_fallthru
    _
  // Predicated region
  $region22: #{discriminator_forward.1} parent=0 // pred_check
    _
  $region23: #{discriminator_forward.1} parent=0 // pred_check_branch
    %31 = sbr.rel (0) target = $region25
  $region24: #{discriminator_forward.1} parent=0 // pred_region
    _
  $region25: #{discriminator_forward.1} parent=0 // pred_fallthru
    _
  // Predicated region
  $region26: #{discriminator_forward.1} parent=0 // pred_check
    _
  $region27: #{discriminator_forward.1} parent=0 // pred_check_branch
    %33 = sbr.rel (0) target = $region29
  $region28: #{discriminator_forward.1} parent=0 // pred_region
    _
  $region29: #{discriminator_forward.1} parent=0 // pred_fallthru
    _
  // Predicated region
  $region30: #{discriminator_forward.1} parent=0 // pred_check
    _
  $region31: #{discriminator_forward.1} parent=0 // pred_check_branch
    %35 = sbr.rel (0) target = $region33
  $region32: #{discriminator_forward.1} parent=0 // pred_region
    _
  $region33: #{discriminator_forward.1} parent=0 // pred_fallthru
    _
  // Predicated region
  $region34: #{discriminator_forward.1} parent=0 // pred_check
    _
  $region35: #{discriminator_forward.1} parent=0 // pred_check_branch
    %37 = sbr.rel (0) target = $region37
  $region36: #{discriminator_forward.1} parent=0 // pred_region
    _
  $region37: #{discriminator_forward.1} parent=0 // pred_fallthru
    _
  // Predicated region
  $region38: #{discriminator_forward.1} parent=0 // pred_check
    _
  $region39: #{discriminator_forward.1} parent=0 // pred_check_branch
    %39 = sbr.rel (0) target = $region41
  $region40: #{discriminator_forward.1} parent=0 // pred_region
    _
  $region41: #{discriminator_forward.1} parent=0 // pred_fallthru
    _
  // Predicated region
  $region42: #{discriminator_forward.1} parent=0 // pred_check
    _
  $region43: #{discriminator_forward.1} parent=0 // pred_check_branch
    %41 = sbr.rel (0) target = $region45
  $region44: #{discriminator_forward.1} parent=0 // pred_region
    _
  $region45: #{discriminator_forward.1} parent=0 // pred_fallthru
    _
  // Predicated region
  $region46: #{discriminator_forward.1} parent=0 // pred_check
    _
  $region47: #{discriminator_forward.1} parent=0 // pred_check_branch
    %43 = sbr.rel (0) target = $region49
  $region48: #{discriminator_forward.1} parent=0 // pred_region
    _
  $region49: #{discriminator_forward.1} parent=0 // pred_fallthru
    _
  // Predicated region
  $region50: #{discriminator_forward.1} parent=0 // pred_check
    _
  $region51: #{discriminator_forward.1} parent=0 // pred_check_branch
    %45 = sbr.rel (0) target = $region53
  $region52: #{discriminator_forward.1} parent=0 // pred_region
    _
  $region53: #{discriminator_forward.1} parent=0 // pred_fallthru
    _
  %v46 = vld [vmem:[%s0] sm:$0xff]
  %v47 = vld [vmem:[%s0 + $0x8] sm:$0xff]
  %v48 = vld [vmem:[%s0 + $0x10] sm:$0xff]
  %v49 = vld [vmem:[%s0 + $0x18] sm:$0xff]
  %v50 = vld [vmem:[%s0 + $0x20] sm:$0xff]
  %v51 = vld [vmem:[%s0 + $0x28] sm:$0xff]
  %v52 = vld [vmem:[%s0 + $0x30] sm:$0xff]
  %v53 = vld [vmem:[%s0 + $0x38] sm:$0xff]
  %v54 = vld [vmem:[%s1] sm:$0xf]
  %v55 = vld [vmem:[%s2] sm:$0x1]
  %v57 = vlaneseq
  %v58 = vshrl.u32 %v57, 7
  %v59 = vsub.s32 0, %v58
  %v60 = vrot.slane %v55, %v59
  %vm62 = vcmask 31744
  %v64 = vsel %vm62, %v46, 0
  %v67 = vsel %vm62, %v47, 0
  %v70 = vsel %vm62, %v48, 0
  %v73 = vsel %vm62, %v49, 0
  %v76 = vsel %vm62, %v50, 0
  %v79 = vsel %vm62, %v51, 0
  %v82 = vsel %vm62, %v52, 0
  %v85 = vsel %vm62, %v53, 0
  %vm87 = vcmask 1043456
  %v89 = vsel %vm87, %v54, 0
  %91 = vmatprep.subr.mxu0 0.0
  %92 = vmatpush1.msra.mxu0 0.0
  %93 = vmatprep.subr.mxu0 0.0
  %94 = vmatpush1.msra.mxu0 0.0
  %95 = vmatprep.subr.mxu0 0.0
  %96 = vmatpush1.msra.mxu0 0.0
  %97 = vmatprep.subr.mxu0 0.0
  %98 = vmatpush1.msra.mxu0 0.0
  %99 = vmatprep.subr.mxu0 0.0
  %100 = vmatpush1.msra.mxu0 0.0
  %101 = vmatprep.subr.mxu0 0.0
  %102 = vmatpush1.msra.mxu0 0.0
  %103 = vmatprep.subr.mxu0 0.0
  %104 = vmatpush1.msra.mxu0 0.0
  %105 = vmatprep.subr.mxu0 0.0
  %106 = vmatpush1.msra.mxu0 0.0
  %107 = vmatprep.subr.mxu0 0.0
  %108 = vmatpush1.msra.mxu0 0.0
  %109 = vmatprep.subr.mxu0 0.0
  %110 = vmatpush1.msra.mxu0 0.0
  %111 = vmatprep.subr.mxu0 0.0
  %112 = vmatpush1.msra.mxu0 0.0
  %113 = vmatprep.subr.mxu0 0.0
  %114 = vmatpush1.msra.mxu0 0.0
  %115 = vmatprep.subr.mxu0 0.0
  %116 = vmatpush1.msra.mxu0 0.0
  %117 = vmatprep.subr.mxu0 0.0
  %118 = vmatpush1.msra.mxu0 0.0
  %119 = vmatprep.subr.mxu0 0.0
  %120 = vmatpush1.msra.mxu0 0.0
  %121 = vmatprep.subr.mxu0 0.0
  %122 = vmatpush1.msra.mxu0 %v89
  %123 = vmatprep.subr.mxu0 0.0
  %124 = vmatpush2.msra.mxu0 0.0
  %125 = vmatprep.subr.mxu0 0.0
  %126 = vmatpush2.msra.mxu0 0.0
  %127 = vmatprep.subr.mxu0 0.0
  %128 = vmatpush2.msra.mxu0 0.0
  %129 = vmatprep.subr.mxu0 0.0
  %130 = vmatpush2.msra.mxu0 0.0
  %131 = vmatprep.subr.mxu0 0.0
  %132 = vmatpush2.msra.mxu0 0.0
  %133 = vmatprep.subr.mxu0 0.0
  %134 = vmatpush2.msra.mxu0 0.0
  %135 = vmatprep.subr.mxu0 0.0
  %136 = vmatpush2.msra.mxu0 0.0
  %137 = vmatprep.subr.mxu0 0.0
  %138 = vmatpush2.msra.mxu0 0.0
  %139 = vmatprep.subr.mxu0 0.0
  %140 = vmatpush2.msra.mxu0 0.0
  %141 = vmatprep.subr.mxu0 0.0
  %142 = vmatpush2.msra.mxu0 0.0
  %143 = vmatprep.subr.mxu0 0.0
  %144 = vmatpush2.msra.mxu0 0.0
  %145 = vmatprep.subr.mxu0 0.0
  %146 = vmatpush2.msra.mxu0 0.0
  %147 = vmatprep.subr.mxu0 0.0
  %148 = vmatpush2.msra.mxu0 0.0
  %149 = vmatprep.subr.mxu0 0.0
  %150 = vmatpush2.msra.mxu0 0.0
  %151 = vmatprep.subr.mxu0 0.0
  %152 = vmatpush2.msra.mxu0 0.0
  %153 = vmatprep.subr.mxu0 0.0
  %154 = vmatpush2.msra.mxu0 0.0
  %155 = vmatprep.mubr.f32.mxu0 0.0
  %156 = vmatmul.mubr.f32.gmra.mxu0 %v64
  %v157 = vpop.f32.mrf.mxu0
  %v158 = vadd.f32 %v60, %v157
  %v159 = vpop.f32.mrf.mxu0
  %160 = vmatprep.mubr.f32.mxu0 0.0
  %161 = vmatmul.mubr.f32.gmra.mxu0 %v67
  %v162 = vpop.f32.mrf.mxu0
  %v163 = vadd.f32 %v60, %v162
  %v164 = vpop.f32.mrf.mxu0
  %165 = vmatprep.mubr.f32.mxu0 0.0
  %166 = vmatmul.mubr.f32.gmra.mxu0 %v70
  %v167 = vpop.f32.mrf.mxu0
  %v168 = vadd.f32 %v60, %v167
  %v169 = vpop.f32.mrf.mxu0
  %170 = vmatprep.mubr.f32.mxu0 0.0
  %171 = vmatmul.mubr.f32.gmra.mxu0 %v73
  %v172 = vpop.f32.mrf.mxu0
  %v173 = vadd.f32 %v60, %v172
  %v174 = vpop.f32.mrf.mxu0
  %175 = vmatprep.mubr.f32.mxu0 0.0
  %176 = vmatmul.mubr.f32.gmra.mxu0 %v76
  %v177 = vpop.f32.mrf.mxu0
  %v178 = vadd.f32 %v60, %v177
  %v179 = vpop.f32.mrf.mxu0
  %180 = vmatprep.mubr.f32.mxu0 0.0
  %181 = vmatmul.mubr.f32.gmra.mxu0 %v79
  %v182 = vpop.f32.mrf.mxu0
  %v183 = vadd.f32 %v60, %v182
  %v184 = vpop.f32.mrf.mxu0
  %185 = vmatprep.mubr.f32.mxu0 0.0
  %186 = vmatmul.mubr.f32.gmra.mxu0 %v82
  %v187 = vpop.f32.mrf.mxu0
  %v188 = vadd.f32 %v60, %v187
  %v189 = vpop.f32.mrf.mxu0
  %190 = vmatprep.mubr.f32.mxu0 0.0
  %191 = vmatmul.mubr.f32.gmra.mxu0 %v85
  %v192 = vpop.f32.mrf.mxu0
  %v193 = vadd.f32 %v60, %v192
  %v194 = vpop.f32.mrf.mxu0
  %195 = vdwg.mxu0
  %vm196 = vcmp.gt.f32.partialorder %v158, 0.0
  %vm197 = vcmp.gt.f32.partialorder %v163, 0.0
  %vm198 = vcmp.gt.f32.partialorder %v168, 0.0
  %vm199 = vcmp.gt.f32.partialorder %v173, 0.0
  %vm200 = vcmp.gt.f32.partialorder %v178, 0.0
  %vm201 = vcmp.gt.f32.partialorder %v183, 0.0
  %vm202 = vcmp.gt.f32.partialorder %v188, 0.0
  %vm203 = vcmp.gt.f32.partialorder %v193, 0.0
  %v204 = vmul.f32 %v158, 0.2
  %v205 = vmul.f32 %v163, 0.2
  %v206 = vmul.f32 %v168, 0.2
  %v207 = vmul.f32 %v173, 0.2
  %v208 = vmul.f32 %v178, 0.2
  %v209 = vmul.f32 %v183, 0.2
  %v210 = vmul.f32 %v188, 0.2
  %v211 = vmul.f32 %v193, 0.2
  %v212 = vsel %vm196, %v158, %v204
  %v213 = vsel %vm197, %v163, %v205
  %v214 = vsel %vm198, %v168, %v206
  %v215 = vsel %vm199, %v173, %v207
  %v216 = vsel %vm200, %v178, %v208
  %v217 = vsel %vm201, %v183, %v209
  %v218 = vsel %vm202, %v188, %v210
  %v219 = vsel %vm203, %v193, %v211
  %v220 = vrot.slane %v215, 7
  %v221 = vlaneseq
  %v222 = vshrl.u32 %v221, 7
  %vm223 = vcmp.eq.s32.totalorder %v222, 0
  %v224 = vsel %vm223, 0.0, %v220
  %226 = vrot.lane.b32.xlu0 %v212, 32
  %v227 = vpop.permute.xlu0 %226
  %230 = vrot.lane.b32.xlu0 %v213, 64
  %v231 = vpop.permute.xlu0 %230
  %234 = vrot.lane.b32.xlu0 %v214, 96
  %v235 = vpop.permute.xlu0 %234
  %vm237 = vcmask 261120
  %v238 = vsel %vm237, %v224, %v227
  %vm239 = vcmask 523264
  %v240 = vsel %vm239, %v238, %v231
  %vm241 = vcmask 785408
  %v242 = vsel %vm241, %v240, %v235
  %v243 = vrot.slane %v212, 1
  %vm244 = vcmp.eq.s32.totalorder %v222, 7
  %v245 = vsel %vm244, 0.0, %v243
  %246 = vrot.lane.b32.xlu0 %v214, 32
  %v247 = vpop.permute.xlu0 %246
  %250 = vrot.lane.b32.xlu0 %v215, 64
  %v251 = vpop.permute.xlu0 %250
  %254 = vrot.lane.b32.xlu0 %v245, 96
  %v255 = vpop.permute.xlu0 %254
  %v257 = vsel %vm237, %v213, %v247
  %v258 = vsel %vm239, %v257, %v251
  %v259 = vsel %vm241, %v258, %v255
  %v260 = vrot.slane %v219, 7
  %v261 = vsel %vm223, 0.0, %v260
  %263 = vrot.lane.b32.xlu0 %v216, 32
  %v264 = vpop.permute.xlu0 %263
  %267 = vrot.lane.b32.xlu0 %v217, 64
  %v268 = vpop.permute.xlu0 %267
  %271 = vrot.lane.b32.xlu0 %v218, 96
  %v272 = vpop.permute.xlu0 %271
  %v274 = vsel %vm237, %v261, %v264
  %v275 = vsel %vm239, %v274, %v268
  %v276 = vsel %vm241, %v275, %v272
  %v277 = vrot.slane %v216, 1
  %v278 = vsel %vm244, 0.0, %v277
  %279 = vrot.lane.b32.xlu0 %v218, 32
  %v280 = vpop.permute.xlu0 %279
  %283 = vrot.lane.b32.xlu0 %v219, 64
  %v284 = vpop.permute.xlu0 %283
  %287 = vrot.lane.b32.xlu0 %v278, 96
  %v288 = vpop.permute.xlu0 %287
  %v290 = vsel %vm237, %v217, %v280
  %v291 = vsel %vm239, %v290, %v284
  %v292 = vsel %vm241, %v291, %v288
  %v293 = vld [vmem:[%s3] sm:$0xff]
  %v294 = vld [vmem:[%s3 + $0x8] sm:$0xff]
  %v295 = vld [vmem:[%s3 + $0x10] sm:$0xff]
  %v296 = vld [vmem:[%s3 + $0x18] sm:$0xff]
  %v297 = vld [vmem:[%s3 + $0x20] sm:$0xff]
  %v298 = vld [vmem:[%s3 + $0x28] sm:$0xff]
  %v299 = vld [vmem:[%s3 + $0x30] sm:$0xff]
  %v300 = vld [vmem:[%s3 + $0x38] sm:$0xff]
  %v301 = vld [vmem:[%s3 + $0x40] sm:$0xff]
  %v302 = vld [vmem:[%s3 + $0x48] sm:$0xff]
  %v303 = vld [vmem:[%s3 + $0x50] sm:$0xff]
  %v304 = vld [vmem:[%s3 + $0x58] sm:$0xff]
  %v305 = vld [vmem:[%s3 + $0x60] sm:$0xff]
  %v306 = vld [vmem:[%s3 + $0x68] sm:$0xff]
  %v307 = vld [vmem:[%s3 + $0x70] sm:$0xff]
  %v308 = vld [vmem:[%s3 + $0x78] sm:$0xff]
  %v309 = vld [vmem:[%s4] sm:$0x1]
  %v311 = vlaneseq
  %v312 = vshrl.u32 %v311, 7
  %v313 = vsub.s32 0, %v312
  %v314 = vrot.slane %v309, %v313
  %316 = vmatprep.subr.mxu0 0.0
  %317 = vmatpush1.msra.mxu0 %v308
  %318 = vmatprep.subr.mxu0 0.0
  %319 = vmatpush1.msra.mxu0 %v307
  %320 = vmatprep.subr.mxu0 0.0
  %321 = vmatpush1.msra.mxu0 %v306
  %322 = vmatprep.subr.mxu0 0.0
  %323 = vmatpush1.msra.mxu0 %v305
  %324 = vmatprep.subr.mxu0 0.0
  %325 = vmatpush1.msra.mxu0 %v304
  %326 = vmatprep.subr.mxu0 0.0
  %327 = vmatpush1.msra.mxu0 %v303
  %328 = vmatprep.subr.mxu0 0.0
  %329 = vmatpush1.msra.mxu0 %v302
  %330 = vmatprep.subr.mxu0 0.0
  %331 = vmatpush1.msra.mxu0 %v301
  %332 = vmatprep.subr.mxu0 0.0
  %333 = vmatpush1.msra.mxu0 %v300
  %334 = vmatprep.subr.mxu0 0.0
  %335 = vmatpush1.msra.mxu0 %v299
  %336 = vmatprep.subr.mxu0 0.0
  %337 = vmatpush1.msra.mxu0 %v298
  %338 = vmatprep.subr.mxu0 0.0
  %339 = vmatpush1.msra.mxu0 %v297
  %340 = vmatprep.subr.mxu0 0.0
  %341 = vmatpush1.msra.mxu0 %v296
  %342 = vmatprep.subr.mxu0 0.0
  %343 = vmatpush1.msra.mxu0 %v295
  %344 = vmatprep.subr.mxu0 0.0
  %345 = vmatpush1.msra.mxu0 %v294
  %346 = vmatprep.subr.mxu0 0.0
  %347 = vmatpush1.msra.mxu0 %v293
  %348 = vmatprep.subr.mxu0 0.0
  %349 = vmatpush2.msra.mxu0 0.0
  %350 = vmatprep.subr.mxu0 0.0
  %351 = vmatpush2.msra.mxu0 0.0
  %352 = vmatprep.subr.mxu0 0.0
  %353 = vmatpush2.msra.mxu0 0.0
  %354 = vmatprep.subr.mxu0 0.0
  %355 = vmatpush2.msra.mxu0 0.0
  %356 = vmatprep.subr.mxu0 0.0
  %357 = vmatpush2.msra.mxu0 0.0
  %358 = vmatprep.subr.mxu0 0.0
  %359 = vmatpush2.msra.mxu0 0.0
  %360 = vmatprep.subr.mxu0 0.0
  %361 = vmatpush2.msra.mxu0 0.0
  %362 = vmatprep.subr.mxu0 0.0
  %363 = vmatpush2.msra.mxu0 0.0
  %364 = vmatprep.subr.mxu0 0.0
  %365 = vmatpush2.msra.mxu0 0.0
  %366 = vmatprep.subr.mxu0 0.0
  %367 = vmatpush2.msra.mxu0 0.0
  %368 = vmatprep.subr.mxu0 0.0
  %369 = vmatpush2.msra.mxu0 0.0
  %370 = vmatprep.subr.mxu0 0.0
  %371 = vmatpush2.msra.mxu0 0.0
  %372 = vmatprep.subr.mxu0 0.0
  %373 = vmatpush2.msra.mxu0 0.0
  %374 = vmatprep.subr.mxu0 0.0
  %375 = vmatpush2.msra.mxu0 0.0
  %376 = vmatprep.subr.mxu0 0.0
  %377 = vmatpush2.msra.mxu0 0.0
  %378 = vmatprep.subr.mxu0 0.0
  %379 = vmatpush2.msra.mxu0 0.0
  %380 = vmatprep.mubr.f32.mxu0 0.0
  %381 = vmatmul.mubr.f32.gmra.mxu0 %v242
  %v382 = vpop.f32.mrf.mxu0
  %v383 = vadd.f32 %v314, %v382
  %v384 = vpop.f32.mrf.mxu0
  %385 = vmatprep.mubr.f32.mxu0 0.0
  %386 = vmatmul.mubr.f32.gmra.mxu0 %v259
  %v387 = vpop.f32.mrf.mxu0
  %v388 = vadd.f32 %v314, %v387
  %v389 = vpop.f32.mrf.mxu0
  %390 = vmatprep.mubr.f32.mxu0 0.0
  %391 = vmatmul.mubr.f32.gmra.mxu0 %v276
  %v392 = vpop.f32.mrf.mxu0
  %v393 = vadd.f32 %v314, %v392
  %v394 = vpop.f32.mrf.mxu0
  %395 = vmatprep.mubr.f32.mxu0 0.0
  %396 = vmatmul.mubr.f32.gmra.mxu0 %v292
  %v397 = vpop.f32.mrf.mxu0
  %v398 = vadd.f32 %v314, %v397
  %v399 = vpop.f32.mrf.mxu0
  %400 = vdwg.mxu0
  %v401 = vld [vmem:[%s5] sm:$0x1]
  %v402 = vld [vmem:[%s6] sm:$0x1]
  %v403 = vsel %vm239, %v383, 0.0
  %v404 = vsel %vm239, %v388, 0.0
  %v405 = vadd.f32 %v403, %v404
  %v406 = vsel %vm239, %v393, 0.0
  %v407 = vadd.f32 %v405, %v406
  %v408 = vsel %vm239, %v398, 0.0
  %v409 = vadd.f32 %v407, %v408
  %v410 = vrot.slane %v409, 4
  %v411 = vadd.f32 %v409, %v410
  %v412 = vrot.slane %v411, 2
  %v413 = vadd.f32 %v411, %v412
  %v414 = vrot.slane %v413, 1
  %v415 = vadd.f32 %v413, %v414
  %v416 = vrcp.pop 32.0
  %v417 = vmul.f32 %v415, %v416
  %v418 = vsub.f32 %v383, %v417
  %v419 = vsub.f32 %v388, %v417
  %v420 = vsub.f32 %v393, %v417
  %v421 = vsub.f32 %v398, %v417
  %v422 = vmul.f32 %v418, %v418
  %v423 = vmul.f32 %v419, %v419
  %v424 = vmul.f32 %v420, %v420
  %v425 = vmul.f32 %v421, %v421
  %v426 = vsel %vm239, %v422, 0.0
  %v427 = vsel %vm239, %v423, 0.0
  %v428 = vadd.f32 %v426, %v427
  %v429 = vsel %vm239, %v424, 0.0
  %v430 = vadd.f32 %v428, %v429
  %v431 = vsel %vm239, %v425, 0.0
  %v432 = vadd.f32 %v430, %v431
  %v433 = vrot.slane %v432, 4
  %v434 = vadd.f32 %v432, %v433
  %v435 = vrot.slane %v434, 2
  %v436 = vadd.f32 %v434, %v435
  %v437 = vrot.slane %v436, 1
  %v438 = vadd.f32 %v436, %v437
  %v439 = vmul.f32 %v438, %v416
  %v440 = vadd.f32 %v439, 1e-05
  %v441 = vrsqrt.pop %v440
  %v442 = vmul.f32 %v418, %v441
  %v443 = vmul.f32 %v419, %v441
  %v444 = vmul.f32 %v420, %v441
  %v445 = vmul.f32 %v421, %v441
  %v447 = vlaneseq
  %v448 = vshrl.u32 %v447, 7
  %v449 = vsub.s32 0, %v448
  %v450 = vrot.slane %v401, %v449
  %v452 = vmul.f32 %v450, %v442
  %v453 = vmul.f32 %v450, %v443
  %v454 = vmul.f32 %v450, %v444
  %v455 = vmul.f32 %v450, %v445
  %v457 = vlaneseq
  %v458 = vshrl.u32 %v457, 7
  %v459 = vsub.s32 0, %v458
  %v460 = vrot.slane %v402, %v459
  %v462 = vadd.f32 %v452, %v460
  %v463 = vadd.f32 %v453, %v460
  %v464 = vadd.f32 %v454, %v460
  %v465 = vadd.f32 %v455, %v460
  %vm466 = vcmp.gt.f32.partialorder %v462, 0.0
  %vm467 = vcmp.gt.f32.partialorder %v463, 0.0
  %vm468 = vcmp.gt.f32.partialorder %v464, 0.0
  %vm469 = vcmp.gt.f32.partialorder %v465, 0.0
  %v470 = vmul.f32 %v462, 0.2
  %v471 = vmul.f32 %v463, 0.2
  %v472 = vmul.f32 %v464, 0.2
  %v473 = vmul.f32 %v465, 0.2
  %v474 = vsel %vm466, %v462, %v470
  %v475 = vsel %vm467, %v463, %v471
  %v476 = vsel %vm468, %v464, %v472
  %v477 = vsel %vm469, %v465, %v473
  %v478 = vrot.slane %v475, 7
  %v479 = vsel %vm223, 0.0, %v478
  %v480 = vrot.slane %v474, 1
  %v481 = vsel %vm244, 0.0, %v480
  %483 = vrot.lane.b32.xlu0 %v474, 64
  %v484 = vpop.permute.xlu0 %483
  %487 = vrot.lane.b32.xlu0 %v481, 64
  %v488 = vpop.permute.xlu0 %487
  %v490 = vsel %vm239, %v479, %v484
  %v491 = vsel %vm239, %v475, %v488
  %v492 = vrot.slane %v477, 7
  %v493 = vsel %vm223, 0.0, %v492
  %v494 = vrot.slane %v476, 1
  %v495 = vsel %vm244, 0.0, %v494
  %497 = vrot.lane.b32.xlu0 %v476, 64
  %v498 = vpop.permute.xlu0 %497
  %501 = vrot.lane.b32.xlu0 %v495, 64
  %v502 = vpop.permute.xlu0 %501
  %v504 = vsel %vm239, %v493, %v498
  %v505 = vsel %vm239, %v477, %v502
  %v506 = vld [vmem:[%s7] sm:$0xff]
  %v507 = vld [vmem:[%s7 + $0x8] sm:$0xff]
  %v508 = vld [vmem:[%s7 + $0x10] sm:$0xff]
  %v509 = vld [vmem:[%s7 + $0x18] sm:$0xff]
  %v510 = vld [vmem:[%s7 + $0x20] sm:$0xff]
  %v511 = vld [vmem:[%s7 + $0x28] sm:$0xff]
  %v512 = vld [vmem:[%s7 + $0x30] sm:$0xff]
  %v513 = vld [vmem:[%s7 + $0x38] sm:$0xff]
  %v514 = vld [vmem:[%s7 + $0x40] sm:$0xff]
  %v515 = vld [vmem:[%s7 + $0x48] sm:$0xff]
  %v516 = vld [vmem:[%s7 + $0x50] sm:$0xff]
  %v517 = vld [vmem:[%s7 + $0x58] sm:$0xff]
  %v518 = vld [vmem:[%s7 + $0x60] sm:$0xff]
  %v519 = vld [vmem:[%s7 + $0x68] sm:$0xff]
  %v520 = vld [vmem:[%s7 + $0x70] sm:$0xff]
  %v521 = vld [vmem:[%s7 + $0x78] sm:$0xff]
  %v522 = vld [vmem:[%s7 + $0x80] sm:$0xff]
  %v523 = vld [vmem:[%s7 + $0x88] sm:$0xff]
  %v524 = vld [vmem:[%s7 + $0x90] sm:$0xff]
  %v525 = vld [vmem:[%s7 + $0x98] sm:$0xff]
  %v526 = vld [vmem:[%s7 + $0xa0] sm:$0xff]
  %v527 = vld [vmem:[%s7 + $0xa8] sm:$0xff]
  %v528 = vld [vmem:[%s7 + $0xb0] sm:$0xff]
  %v529 = vld [vmem:[%s7 + $0xb8] sm:$0xff]
  %v530 = vld [vmem:[%s7 + $0xc0] sm:$0xff]
  %v531 = vld [vmem:[%s7 + $0xc8] sm:$0xff]
  %v532 = vld [vmem:[%s7 + $0xd0] sm:$0xff]
  %v533 = vld [vmem:[%s7 + $0xd8] sm:$0xff]
  %v534 = vld [vmem:[%s7 + $0xe0] sm:$0xff]
  %v535 = vld [vmem:[%s7 + $0xe8] sm:$0xff]
  %v536 = vld [vmem:[%s7 + $0xf0] sm:$0xff]
  %v537 = vld [vmem:[%s7 + $0xf8] sm:$0xff]
  %v538 = vld [vmem:[%s8] sm:$0x1]
  %v540 = vlaneseq
  %v541 = vshrl.u32 %v540, 7
  %v542 = vsub.s32 0, %v541
  %v543 = vrot.slane %v538, %v542
  %545 = vmatprep.subr.mxu0 0.0
  %546 = vmatpush1.msra.mxu0 %v521
  %547 = vmatprep.subr.mxu0 0.0
  %548 = vmatpush1.msra.mxu0 %v520
  %549 = vmatprep.subr.mxu0 0.0
  %550 = vmatpush1.msra.mxu0 %v519
  %551 = vmatprep.subr.mxu0 0.0
  %552 = vmatpush1.msra.mxu0 %v518
  %553 = vmatprep.subr.mxu0 0.0
  %554 = vmatpush1.msra.mxu0 %v517
  %555 = vmatprep.subr.mxu0 0.0
  %556 = vmatpush1.msra.mxu0 %v516
  %557 = vmatprep.subr.mxu0 0.0
  %558 = vmatpush1.msra.mxu0 %v515
  %559 = vmatprep.subr.mxu0 0.0
  %560 = vmatpush1.msra.mxu0 %v514
  %561 = vmatprep.subr.mxu0 0.0
  %562 = vmatpush1.msra.mxu0 %v513
  %563 = vmatprep.subr.mxu0 0.0
  %564 = vmatpush1.msra.mxu0 %v512
  %565 = vmatprep.subr.mxu0 0.0
  %566 = vmatpush1.msra.mxu0 %v511
  %567 = vmatprep.subr.mxu0 0.0
  %568 = vmatpush1.msra.mxu0 %v510
  %569 = vmatprep.subr.mxu0 0.0
  %570 = vmatpush1.msra.mxu0 %v509
  %571 = vmatprep.subr.mxu0 0.0
  %572 = vmatpush1.msra.mxu0 %v508
  %573 = vmatprep.subr.mxu0 0.0
  %574 = vmatpush1.msra.mxu0 %v507
  %575 = vmatprep.subr.mxu0 0.0
  %576 = vmatpush1.msra.mxu0 %v506
  %577 = vmatprep.subr.mxu0 0.0
  %578 = vmatpush2.msra.mxu0 %v537
  %579 = vmatprep.subr.mxu0 0.0
  %580 = vmatpush2.msra.mxu0 %v536
  %581 = vmatprep.subr.mxu0 0.0
  %582 = vmatpush2.msra.mxu0 %v535
  %583 = vmatprep.subr.mxu0 0.0
  %584 = vmatpush2.msra.mxu0 %v534
  %585 = vmatprep.subr.mxu0 0.0
  %586 = vmatpush2.msra.mxu0 %v533
  %587 = vmatprep.subr.mxu0 0.0
  %588 = vmatpush2.msra.mxu0 %v532
  %589 = vmatprep.subr.mxu0 0.0
  %590 = vmatpush2.msra.mxu0 %v531
  %591 = vmatprep.subr.mxu0 0.0
  %592 = vmatpush2.msra.mxu0 %v530
  %593 = vmatprep.subr.mxu0 0.0
  %594 = vmatpush2.msra.mxu0 %v529
  %595 = vmatprep.subr.mxu0 0.0
  %596 = vmatpush2.msra.mxu0 %v528
  %597 = vmatprep.subr.mxu0 0.0
  %598 = vmatpush2.msra.mxu0 %v527
  %599 = vmatprep.subr.mxu0 0.0
  %600 = vmatpush2.msra.mxu0 %v526
  %601 = vmatprep.subr.mxu0 0.0
  %602 = vmatpush2.msra.mxu0 %v525
  %603 = vmatprep.subr.mxu0 0.0
  %604 = vmatpush2.msra.mxu0 %v524
  %605 = vmatprep.subr.mxu0 0.0
  %606 = vmatpush2.msra.mxu0 %v523
  %607 = vmatprep.subr.mxu0 0.0
  %608 = vmatpush2.msra.mxu0 %v522
  %609 = vmatprep.mubr.f32.mxu0 %v491
  %610 = vmatmul.mubr.f32.gmra.mxu0 %v490
  %v611 = vpop.f32.mrf.mxu0
  %v612 = vadd.f32 %v543, %v611
  %v613 = vpop.f32.mrf.mxu0
  %614 = vmatprep.mubr.f32.mxu0 %v505
  %615 = vmatmul.mubr.f32.gmra.mxu0 %v504
  %v616 = vpop.f32.mrf.mxu0
  %v617 = vadd.f32 %v543, %v616
  %v618 = vpop.f32.mrf.mxu0
  %619 = vdwg.mxu0
  %v620 = vld [vmem:[%s9] sm:$0x1]
  %v621 = vld [vmem:[%s10] sm:$0x1]
  %v622 = vadd.f32 %v612, %v617
  %v623 = vrot.slane %v622, 4
  %v624 = vadd.f32 %v622, %v623
  %v625 = vrot.slane %v624, 2
  %v626 = vadd.f32 %v624, %v625
  %v627 = vrot.slane %v626, 1
  %v628 = vadd.f32 %v626, %v627
  %v629 = vrcp.pop 16.0
  %v630 = vmul.f32 %v628, %v629
  %v631 = vsub.f32 %v612, %v630
  %v632 = vsub.f32 %v617, %v630
  %v633 = vmul.f32 %v631, %v631
  %v634 = vmul.f32 %v632, %v632
  %v635 = vadd.f32 %v633, %v634
  %v636 = vrot.slane %v635, 4
  %v637 = vadd.f32 %v635, %v636
  %v638 = vrot.slane %v637, 2
  %v639 = vadd.f32 %v637, %v638
  %v640 = vrot.slane %v639, 1
  %v641 = vadd.f32 %v639, %v640
  %v642 = vmul.f32 %v641, %v629
  %v643 = vadd.f32 %v642, 1e-05
  %v644 = vrsqrt.pop %v643
  %v645 = vmul.f32 %v631, %v644
  %v646 = vmul.f32 %v632, %v644
  %v648 = vlaneseq
  %v649 = vshrl.u32 %v648, 7
  %v650 = vsub.s32 0, %v649
  %v651 = vrot.slane %v620, %v650
  %v653 = vmul.f32 %v651, %v645
  %v654 = vmul.f32 %v651, %v646
  %v656 = vlaneseq
  %v657 = vshrl.u32 %v656, 7
  %v658 = vsub.s32 0, %v657
  %v659 = vrot.slane %v621, %v658
  %v661 = vadd.f32 %v653, %v659
  %v662 = vadd.f32 %v654, %v659
  %vm663 = vcmp.gt.f32.partialorder %v661, 0.0
  %vm664 = vcmp.gt.f32.partialorder %v662, 0.0
  %v665 = vmul.f32 %v661, 0.2
  %v666 = vmul.f32 %v662, 0.2
  %v667 = vsel %vm663, %v661, %v665
  %v668 = vsel %vm664, %v662, %v666
  %v669 = vrot.slane %v667, 1
  %v670 = vsel %vm244, 0.0, %v669
  %v671 = vrot.slane %v667, 7
  %v672 = vsel %vm223, 0.0, %v671
  %v673 = vrot.slane %v670, 1
  %v674 = vsel %vm244, 0.0, %v673
  %v675 = vrot.slane %v668, 1
  %v676 = vsel %vm244, 0.0, %v675
  %v677 = vrot.slane %v668, 7
  %v678 = vsel %vm223, 0.0, %v677
  %v679 = vrot.slane %v676, 1
  %v680 = vsel %vm244, 0.0, %v679
  %v681 = vld [vmem:[%s11] sm:$0xff]
  %v682 = vld [vmem:[%s11 + $0x8] sm:$0xff]
  %v683 = vld [vmem:[%s11 + $0x10] sm:$0xff]
  %v684 = vld [vmem:[%s11 + $0x18] sm:$0xff]
  %v685 = vld [vmem:[%s11 + $0x20] sm:$0xff]
  %v686 = vld [vmem:[%s11 + $0x28] sm:$0xff]
  %v687 = vld [vmem:[%s11 + $0x30] sm:$0xff]
  %v688 = vld [vmem:[%s11 + $0x38] sm:$0xff]
  %v689 = vld [vmem:[%s11 + $0x40] sm:$0xff]
  %v690 = vld [vmem:[%s11 + $0x48] sm:$0xff]
  %v691 = vld [vmem:[%s11 + $0x50] sm:$0xff]
  %v692 = vld [vmem:[%s11 + $0x58] sm:$0xff]
  %v693 = vld [vmem:[%s11 + $0x60] sm:$0xff]
  %v694 = vld [vmem:[%s11 + $0x68] sm:$0xff]
  %v695 = vld [vmem:[%s11 + $0x70] sm:$0xff]
  %v696 = vld [vmem:[%s11 + $0x78] sm:$0xff]
  %v697 = vld [vmem:[%s11 + $0x80] sm:$0xff]
  %v698 = vld [vmem:[%s11 + $0x88] sm:$0xff]
  %v699 = vld [vmem:[%s11 + $0x90] sm:$0xff]
  %v700 = vld [vmem:[%s11 + $0x98] sm:$0xff]
  %v701 = vld [vmem:[%s11 + $0xa0] sm:$0xff]
  %v702 = vld [vmem:[%s11 + $0xa8] sm:$0xff]
  %v703 = vld [vmem:[%s11 + $0xb0] sm:$0xff]
  %v704 = vld [vmem:[%s11 + $0xb8] sm:$0xff]
  %v705 = vld [vmem:[%s11 + $0xc0] sm:$0xff]
  %v706 = vld [vmem:[%s11 + $0xc8] sm:$0xff]
  %v707 = vld [vmem:[%s11 + $0xd0] sm:$0xff]
  %v708 = vld [vmem:[%s11 + $0xd8] sm:$0xff]
  %v709 = vld [vmem:[%s11 + $0xe0] sm:$0xff]
  %v710 = vld [vmem:[%s11 + $0xe8] sm:$0xff]
  %v711 = vld [vmem:[%s11 + $0xf0] sm:$0xff]
  %v712 = vld [vmem:[%s11 + $0xf8] sm:$0xff]
  %v713 = vld [vmem:[%s11 + $0x100] sm:$0xff]
  %v714 = vld [vmem:[%s11 + $0x108] sm:$0xff]
  %v715 = vld [vmem:[%s11 + $0x110] sm:$0xff]
  %v716 = vld [vmem:[%s11 + $0x118] sm:$0xff]
  %v717 = vld [vmem:[%s11 + $0x120] sm:$0xff]
  %v718 = vld [vmem:[%s11 + $0x128] sm:$0xff]
  %v719 = vld [vmem:[%s11 + $0x130] sm:$0xff]
  %v720 = vld [vmem:[%s11 + $0x138] sm:$0xff]
  %v721 = vld [vmem:[%s11 + $0x140] sm:$0xff]
  %v722 = vld [vmem:[%s11 + $0x148] sm:$0xff]
  %v723 = vld [vmem:[%s11 + $0x150] sm:$0xff]
  %v724 = vld [vmem:[%s11 + $0x158] sm:$0xff]
  %v725 = vld [vmem:[%s11 + $0x160] sm:$0xff]
  %v726 = vld [vmem:[%s11 + $0x168] sm:$0xff]
  %v727 = vld [vmem:[%s11 + $0x170] sm:$0xff]
  %v728 = vld [vmem:[%s11 + $0x178] sm:$0xff]
  %v729 = vld [vmem:[%s11 + $0x180] sm:$0xff]
  %v730 = vld [vmem:[%s11 + $0x188] sm:$0xff]
  %v731 = vld [vmem:[%s11 + $0x190] sm:$0xff]
  %v732 = vld [vmem:[%s11 + $0x198] sm:$0xff]
  %v733 = vld [vmem:[%s11 + $0x1a0] sm:$0xff]
  %v734 = vld [vmem:[%s11 + $0x1a8] sm:$0xff]
  %v735 = vld [vmem:[%s11 + $0x1b0] sm:$0xff]
  %v736 = vld [vmem:[%s11 + $0x1b8] sm:$0xff]
  %v737 = vld [vmem:[%s11 + $0x1c0] sm:$0xff]
  %v738 = vld [vmem:[%s11 + $0x1c8] sm:$0xff]
  %v739 = vld [vmem:[%s11 + $0x1d0] sm:$0xff]
  %v740 = vld [vmem:[%s11 + $0x1d8] sm:$0xff]
  %v741 = vld [vmem:[%s11 + $0x1e0] sm:$0xff]
  %v742 = vld [vmem:[%s11 + $0x1e8] sm:$0xff]
  %v743 = vld [vmem:[%s11 + $0x1f0] sm:$0xff]
  %v744 = vld [vmem:[%s11 + $0x1f8] sm:$0xff]
  %v745 = vld [vmem:[#allocation2] sm:$0x1]
  %v747 = vlaneseq
  %v748 = vshrl.u32 %v747, 7
  %v749 = vsub.s32 0, %v748
  %v750 = vrot.slane %v745, %v749
  %752 = vmatprep.subr.mxu0 0.0
  %753 = vmatpush1.msra.mxu0 %v696
  %754 = vmatprep.subr.mxu0 0.0
  %755 = vmatpush1.msra.mxu0 %v695
  %756 = vmatprep.subr.mxu0 0.0
  %757 = vmatpush1.msra.mxu0 %v694
  %758 = vmatprep.subr.mxu0 0.0
  %759 = vmatpush1.msra.mxu0 %v693
  %760 = vmatprep.subr.mxu0 0.0
  %761 = vmatpush1.msra.mxu0 %v692
  %762 = vmatprep.subr.mxu0 0.0
  %763 = vmatpush1.msra.mxu0 %v691
  %764 = vmatprep.subr.mxu0 0.0
  %765 = vmatpush1.msra.mxu0 %v690
  %766 = vmatprep.subr.mxu0 0.0
  %767 = vmatpush1.msra.mxu0 %v689
  %768 = vmatprep.subr.mxu0 0.0
  %769 = vmatpush1.msra.mxu0 %v688
  %770 = vmatprep.subr.mxu0 0.0
  %771 = vmatpush1.msra.mxu0 %v687
  %772 = vmatprep.subr.mxu0 0.0
  %773 = vmatpush1.msra.mxu0 %v686
  %774 = vmatprep.subr.mxu0 0.0
  %775 = vmatpush1.msra.mxu0 %v685
  %776 = vmatprep.subr.mxu0 0.0
  %777 = vmatpush1.msra.mxu0 %v684
  %778 = vmatprep.subr.mxu0 0.0
  %779 = vmatpush1.msra.mxu0 %v683
  %780 = vmatprep.subr.mxu0 0.0
  %781 = vmatpush1.msra.mxu0 %v682
  %782 = vmatprep.subr.mxu0 0.0
  %783 = vmatpush1.msra.mxu0 %v681
  %784 = vmatprep.subr.mxu0 0.0
  %785 = vmatpush2.msra.mxu0 %v712
  %786 = vmatprep.subr.mxu0 0.0
  %787 = vmatpush2.msra.mxu0 %v711
  %788 = vmatprep.subr.mxu0 0.0
  %789 = vmatpush2.msra.mxu0 %v710
  %790 = vmatprep.subr.mxu0 0.0
  %791 = vmatpush2.msra.mxu0 %v709
  %792 = vmatprep.subr.mxu0 0.0
  %793 = vmatpush2.msra.mxu0 %v708
  %794 = vmatprep.subr.mxu0 0.0
  %795 = vmatpush2.msra.mxu0 %v707
  %796 = vmatprep.subr.mxu0 0.0
  %797 = vmatpush2.msra.mxu0 %v706
  %798 = vmatprep.subr.mxu0 0.0
  %799 = vmatpush2.msra.mxu0 %v705
  %800 = vmatprep.subr.mxu0 0.0
  %801 = vmatpush2.msra.mxu0 %v704
  %802 = vmatprep.subr.mxu0 0.0
  %803 = vmatpush2.msra.mxu0 %v703
  %804 = vmatprep.subr.mxu0 0.0
  %805 = vmatpush2.msra.mxu0 %v702
  %806 = vmatprep.subr.mxu0 0.0
  %807 = vmatpush2.msra.mxu0 %v701
  %808 = vmatprep.subr.mxu0 0.0
  %809 = vmatpush2.msra.mxu0 %v700
  %810 = vmatprep.subr.mxu0 0.0
  %811 = vmatpush2.msra.mxu0 %v699
  %812 = vmatprep.subr.mxu0 0.0
  %813 = vmatpush2.msra.mxu0 %v698
  %814 = vmatprep.subr.mxu0 0.0
  %815 = vmatpush2.msra.mxu0 %v697
  %816 = vmatprep.mubr.f32.mxu0 %v667
  %817 = vmatmul.mubr.f32.gmra.mxu0 %v672
  %v818 = vpop.f32.mrf.mxu0
  %v819 = vadd.f32 %v750, %v818
  %v820 = vpop.f32.mrf.mxu0
  %821 = vmatprep.mubr.f32.mxu0 %v668
  %822 = vmatmul.mubr.f32.gmra.mxu0 %v678
  %v823 = vpop.f32.mrf.mxu0
  %v824 = vadd.f32 %v750, %v823
  %v825 = vpop.f32.mrf.mxu0
  %826 = vdwg.mxu0
  %827 = vmatprep.subr.mxu0 0.0
  %828 = vmatpush1.msra.mxu0 %v728
  %829 = vmatprep.subr.mxu0 0.0
  %830 = vmatpush1.msra.mxu0 %v727
  %831 = vmatprep.subr.mxu0 0.0
  %832 = vmatpush1.msra.mxu0 %v726
  %833 = vmatprep.subr.mxu0 0.0
  %834 = vmatpush1.msra.mxu0 %v725
  %835 = vmatprep.subr.mxu0 0.0
  %836 = vmatpush1.msra.mxu0 %v724
  %837 = vmatprep.subr.mxu0 0.0
  %838 = vmatpush1.msra.mxu0 %v723
  %839 = vmatprep.subr.mxu0 0.0
  %840 = vmatpush1.msra.mxu0 %v722
  %841 = vmatprep.subr.mxu0 0.0
  %842 = vmatpush1.msra.mxu0 %v721
  %843 = vmatprep.subr.mxu0 0.0
  %844 = vmatpush1.msra.mxu0 %v720
  %845 = vmatprep.subr.mxu0 0.0
  %846 = vmatpush1.msra.mxu0 %v719
  %847 = vmatprep.subr.mxu0 0.0
  %848 = vmatpush1.msra.mxu0 %v718
  %849 = vmatprep.subr.mxu0 0.0
  %850 = vmatpush1.msra.mxu0 %v717
  %851 = vmatprep.subr.mxu0 0.0
  %852 = vmatpush1.msra.mxu0 %v716
  %853 = vmatprep.subr.mxu0 0.0
  %854 = vmatpush1.msra.mxu0 %v715
  %855 = vmatprep.subr.mxu0 0.0
  %856 = vmatpush1.msra.mxu0 %v714
  %857 = vmatprep.subr.mxu0 0.0
  %858 = vmatpush1.msra.mxu0 %v713
  %859 = vmatprep.subr.mxu0 0.0
  %860 = vmatpush2.msra.mxu0 %v744
  %861 = vmatprep.subr.mxu0 0.0
  %862 = vmatpush2.msra.mxu0 %v743
  %863 = vmatprep.subr.mxu0 0.0
  %864 = vmatpush2.msra.mxu0 %v742
  %865 = vmatprep.subr.mxu0 0.0
  %866 = vmatpush2.msra.mxu0 %v741
  %867 = vmatprep.subr.mxu0 0.0
  %868 = vmatpush2.msra.mxu0 %v740
  %869 = vmatprep.subr.mxu0 0.0
  %870 = vmatpush2.msra.mxu0 %v739
  %871 = vmatprep.subr.mxu0 0.0
  %872 = vmatpush2.msra.mxu0 %v738
  %873 = vmatprep.subr.mxu0 0.0
  %874 = vmatpush2.msra.mxu0 %v737
  %875 = vmatprep.subr.mxu0 0.0
  %876 = vmatpush2.msra.mxu0 %v736
  %877 = vmatprep.subr.mxu0 0.0
  %878 = vmatpush2.msra.mxu0 %v735
  %879 = vmatprep.subr.mxu0 0.0
  %880 = vmatpush2.msra.mxu0 %v734
  %881 = vmatprep.subr.mxu0 0.0
  %882 = vmatpush2.msra.mxu0 %v733
  %883 = vmatprep.subr.mxu0 0.0
  %884 = vmatpush2.msra.mxu0 %v732
  %885 = vmatprep.subr.mxu0 0.0
  %886 = vmatpush2.msra.mxu0 %v731
  %887 = vmatprep.subr.mxu0 0.0
  %888 = vmatpush2.msra.mxu0 %v730
  %889 = vmatprep.subr.mxu0 0.0
  %890 = vmatpush2.msra.mxu0 %v729
  %891 = vmatprep.mubr.f32.mxu0 %v674
  %892 = vmatmul.mubr.f32.gmra.mxu0 %v670
  %v893 = vpop.f32.mrf.mxu0
  %v894 = vadd.f32 %v819, %v893
  %v895 = vpop.f32.mrf.mxu0
  %896 = vmatprep.mubr.f32.mxu0 %v680
  %897 = vmatmul.mubr.f32.gmra.mxu0 %v676
  %v898 = vpop.f32.mrf.mxu0
  %v899 = vadd.f32 %v824, %v898
  %v900 = vpop.f32.mrf.mxu0
  %901 = vdwg.mxu0
  %v902 = vsub.f32 0.0, %v894
  %v903 = vsub.f32 0.0, %v899
  %v904 = vmul.f32 %v902, 1.442695
  %v905 = vpow.pop %v904
  %v906 = vmul.f32 %v903, 1.442695
  %v907 = vpow.pop %v906
  %v908 = vadd.f32 %v905, 1.0
  %v909 = vadd.f32 %v907, 1.0
  %v910 = vrcp.pop %v908
  %v911 = vmul.f32 1.0, %v910
  %v912 = vrcp.pop %v909
  %v913 = vmul.f32 1.0, %v912
  %vm914 = vcmask 7168
  %915 = vst.msk [vmem:[%s13] sm:$0xff] %vm914, %v911
  %916 = vst.msk [vmem:[%s13 + $0x8] sm:$0xff] %vm914, %v913
  // Predicated region
  $region54: #{discriminator_forward.1} parent=0 // pred_check
    _
  $region55: #{discriminator_forward.1} parent=0 // pred_check_branch
    %918 = sbr.rel (0) target = $region57
  $region56: #{discriminator_forward.1} parent=0 // pred_region
    _
  $region57: #{discriminator_forward.1} parent=0 // pred_fallthru
    _
  // Predicated region
  $region58: #{discriminator_forward.1} parent=0 // pred_check
    _
  $region59: #{discriminator_forward.1} parent=0 // pred_check_branch
    %920 = sbr.rel (0) target = $region61
  $region60: #{discriminator_forward.1} parent=0 // pred_region
    _
  $region61: #{discriminator_forward.1} parent=0 // pred_fallthru
    _

</llo_original>
